<compile_context>
chip_gen: v6e
topology: v6e:2x2x1
jax: 0.10.0
libtpu: 0.0.40
codegen_flags: <defaults>
</compile_context>

<pallas_src>
import functools

import jax
import jax.numpy as jnp
from jax.experimental import pallas as pl
from jax.experimental.pallas import tpu as pltpu


def _channel_attention_kernel(x_ref, w1_ref, w2_ref, o_ref, sum_acc, max_acc,
                              *, hw, tile):
    # x_ref:  (C, T_S) f32 spatial tile of one batch element
    # w1_ref: (Ch, C)  f32  (PyTorch Linear(C -> Ch).weight layout)
    # w2_ref: (C, Ch)  f32  (PyTorch Linear(Ch -> C).weight layout)
    # o_ref:  (C, 1)   f32  attention gate for this batch element
    s = pl.program_id(1)
    ns = pl.num_programs(1)

    @pl.when(s == 0)
    def _init():
        sum_acc[...] = jnp.zeros_like(sum_acc)
        max_acc[...] = jnp.full(max_acc.shape, -jnp.inf, dtype=max_acc.dtype)

    x = x_ref[...]                                    # (C, T_S)

    if hw % tile == 0:
        # Every tile is full: pure VPU add/max, overlaps the next tile's DMA.
        sum_acc[...] = sum_acc[...] + x
        max_acc[...] = jnp.maximum(max_acc[...], x)
    else:
        tail = hw % tile                              # static

        @pl.when(s < ns - 1)
        def _acc_full():                              # full tiles: no masking
            sum_acc[...] = sum_acc[...] + x
            max_acc[...] = jnp.maximum(max_acc[...], x)

        @pl.when(s == ns - 1)
        def _acc_tail():                              # only the ragged tail
            lane = jax.lax.broadcasted_iota(jnp.int32, x.shape, 1)
            valid = lane < tail
            sum_acc[...] = sum_acc[...] + jnp.where(valid, x, 0.0)
            max_acc[...] = jnp.maximum(max_acc[...],
                                       jnp.where(valid, x, -jnp.inf))

    @pl.when(s == ns - 1)
    def _finalize():
        inv_hw = jnp.float32(1.0 / hw)                # static scalar, no divide
        avg = jnp.sum(sum_acc[...], axis=-1, keepdims=True) * inv_hw   # (C, 1)
        mxv = jnp.max(max_acc[...], axis=-1, keepdims=True)            # (C, 1)

        w1 = w1_ref[...]                              # (Ch, C)
        w2 = w2_ref[...]                              # (C, Ch)

        def fc(v):                                    # v: (C, 1) column vector
            h = jnp.dot(w1, v, preferred_element_type=jnp.float32)     # (Ch, 1)
            h = jnp.maximum(h, 0.0)                                    # ReLU
            o = jnp.dot(w2, h, preferred_element_type=jnp.float32)     # (C, 1)
            return jax.nn.sigmoid(o)                                   # Sigmoid

        # The reference module applies Sigmoid inside fc (per branch) and then
        # sums the two branches.
        o_ref[...] = fc(avg) + fc(mxv)                # (C, 1)


def _pick_spatial_tile(c, hw, target_bytes=2 << 20):
    """Spatial tile (lanes): multiple of 128, sized for ~target_bytes blocks."""
    lanes = (target_bytes // (4 * c)) // 128 * 128
    lanes = max(512, min(8192, lanes))
    if hw <= lanes:
        return hw                                     # single full-extent block
    return lanes


def channel_attention(x, w1, w2, *, spatial_tile=None):
    """x: (B, C, H, W) f32; w1: (Ch, C); w2: (C, Ch) (PyTorch Linear layout)."""
    B, C, H, W = x.shape
    Ch = w1.shape[0]
    HW = H * W
    x_flat = x.reshape(B, C, HW)                      # free reshape (NCHW row-major)

    t_s = spatial_tile if spatial_tile is not None else _pick_spatial_tile(C, HW)
    ns = pl.cdiv(HW, t_s)

    block_bytes = C * t_s * 4
    # 2x double-buffered input tile + 2 scratch accumulators + headroom;
    # fits the small v5e scoped default for typical sizes, capped well under
    # v7x's 64 MiB physical VMEM.
    vmem_limit = int(min(48 << 20, max(16 << 20, 4 * block_bytes + (2 << 20))))

    kernel = functools.partial(_channel_attention_kernel, hw=HW, tile=t_s)

    grid_spec = pltpu.PrefetchScalarGridSpec(
        num_scalar_prefetch=0,
        grid=(B, ns),                                 # reduction axis last
        in_specs=[
            pl.BlockSpec((None, C, t_s), lambda b, s: (b, 0, s)),  # x tile
            pl.BlockSpec((Ch, C), lambda b, s: (0, 0)),            # w1 (resident)
            pl.BlockSpec((C, Ch), lambda b, s: (0, 0)),            # w2 (resident)
        ],
        out_specs=pl.BlockSpec((None, C, 1), lambda b, s: (b, 0, 0)),
        scratch_shapes=[
            pltpu.VMEM((C, t_s), jnp.float32),        # running sum
            pltpu.VMEM((C, t_s), jnp.float32),        # running max
        ],
    )

    out = pl.pallas_call(
        kernel,
        out_shape=jax.ShapeDtypeStruct((B, C, 1), jnp.float32),
        grid_spec=grid_spec,
        compiler_params=pltpu.CompilerParams(
            dimension_semantics=("parallel", "arbitrary"),
            vmem_limit_bytes=vmem_limit,
        ),
        cost_estimate=pl.CostEstimate(
            flops=2 * B * C * HW + 8 * B * C * max(Ch, 1),
            transcendentals=2 * B * C,
            bytes_accessed=4 * (B * C * HW + 2 * C * Ch + B * C),
        ),
    )(x_flat, w1, w2)

    # .unsqueeze(2).unsqueeze(3)
    return out.reshape(B, C, 1, 1)


def _reference(x, w1, w2):
    avg = jnp.mean(x, axis=(2, 3))
    mxv = jnp.max(x, axis=(2, 3))

    def fc(v):
        h = jnp.maximum(v @ w1.T, 0.0)
        return jax.nn.sigmoid(h @ w2.T)

    return (fc(avg) + fc(mxv))[:, :, None, None]


if __name__ == "__main__":
    # in_channels must be >= reduction(=16) so the hidden dim is nonzero.
    B, C, H, W = 2, 32, 16, 16
    reduction = 16
    Ch = C // reduction                               # hidden = 2

    key = jax.random.PRNGKey(0)
    kx, k1, k2 = jax.random.split(key, 3)
    x = jax.random.normal(kx, (B, C, H, W), dtype=jnp.float32)
    # Deterministic synthetic weights (PyTorch Linear weight layout: (out, in)).
    w1 = jax.random.normal(k1, (Ch, C), dtype=jnp.float32) * 0.1
    w2 = jax.random.normal(k2, (C, Ch), dtype=jnp.float32) * 0.1

    # Force a 2-step spatial grid (tiles of 128 lanes) so the pipelined
    # accumulate / finalize path is exercised even at this small size.
    out = channel_attention(x, w1, w2, spatial_tile=128)
    jax.block_until_ready(out)
    assert out.shape == (B, C, 1, 1), out.shape
    assert out.dtype == jnp.float32
    ref = _reference(x, w1, w2)
    assert jnp.allclose(out, ref, atol=1e-2, rtol=1e-2), (
        float(jnp.max(jnp.abs(out - ref))))

    # Ragged spatial extent (H*W = 144, tile = 128) exercises the masked tail.
    x2 = jax.random.normal(kx, (B, C, 12, 12), dtype=jnp.float32)
    out2 = channel_attention(x2, w1, w2, spatial_tile=128)
    jax.block_until_ready(out2)
    ref2 = _reference(x2, w1, w2)
    assert jnp.allclose(out2, ref2, atol=1e-2, rtol=1e-2), (
        float(jnp.max(jnp.abs(out2 - ref2))))

    # Auto-picked tile: full-extent single block (HW = 1600 not a lane multiple).
    x3 = jax.random.normal(kx, (B, C, 40, 40), dtype=jnp.float32)
    out3 = channel_attention(x3, w1, w2)
    jax.block_until_ready(out3)
    ref3 = _reference(x3, w1, w2)
    assert jnp.allclose(out3, ref3, atol=1e-2, rtol=1e-2), (
        float(jnp.max(jnp.abs(out3 - ref3))))

    print("KERNEL_OK")
</pallas_src>

<mosaic_0001>
module attributes {stable_mosaic.version = 11 : i64} {
  func.func @_channel_attention_kernel(%arg0: i32, %arg1: i32, %arg2: memref<1x32x128xf32, #tpu.memory_space<vmem>>, %arg3: memref<2x32xf32, #tpu.memory_space<vmem>>, %arg4: memref<32x2xf32, #tpu.memory_space<vmem>>, %arg5: memref<1x32x1xf32, #tpu.memory_space<vmem>>, %arg6: memref<32x128xf32, #tpu.memory_space<vmem>>, %arg7: memref<32x128xf32, #tpu.memory_space<vmem>>) attributes {dimension_semantics = [#tpu.dimension_semantics<parallel>, #tpu.dimension_semantics<arbitrary>], iteration_bounds = array<i64: 2, 2>, scalar_prefetch = 0 : i64, scratch_operands = 2 : i64, tpu.core_type = #tpu.core_type<tc>, window_params = [{transform_indices = @transform_0, window_bounds = array<i64: 1, 32, 128>}, {pipeline_mode = #tpu.pipeline_mode<synchronous>, transform_indices = @transform_1, window_bounds = array<i64: 2, 32>}, {pipeline_mode = #tpu.pipeline_mode<synchronous>, transform_indices = @transform_2, window_bounds = array<i64: 32, 2>}, {transform_indices = @transform_3, window_bounds = array<i64: 1, 32, 1>}]} {
    %c0_i32 = arith.constant 0 : i32
    %0 = arith.cmpi eq, %arg1, %c0_i32 : i32
    %1 = arith.extui %0 : i1 to i32
    %c0_i32_0 = arith.constant 0 : i32
    %2 = arith.cmpi ne, %1, %c0_i32_0 : i32
    scf.if %2 {
      %cst = arith.constant 0.000000e+00 : f32
      %14 = vector.broadcast %cst : f32 to vector<32x128xf32>
      %c0_12 = arith.constant 0 : index
      %c0_13 = arith.constant 0 : index
      %15 = vector.load %arg6[%c0_12, %c0_13] : memref<32x128xf32, #tpu.memory_space<vmem>>, vector<32x128xf32>
      tpu.vector_store %arg6[%c0_12, %c0_13], %14 {strides = array<i32>} : memref<32x128xf32, #tpu.memory_space<vmem>>, vector<32x128xf32>,
      %cst_14 = arith.constant 0xFF800000 : f32
      %16 = vector.broadcast %cst_14 : f32 to vector<32x128xf32>
      %c0_15 = arith.constant 0 : index
      %c0_16 = arith.constant 0 : index
      %17 = vector.load %arg7[%c0_15, %c0_16] : memref<32x128xf32, #tpu.memory_space<vmem>>, vector<32x128xf32>
      tpu.vector_store %arg7[%c0_15, %c0_16], %16 {strides = array<i32>} : memref<32x128xf32, #tpu.memory_space<vmem>>, vector<32x128xf32>,
    } else {
    }
    %c0 = arith.constant 0 : index
    %c0_1 = arith.constant 0 : index
    %c0_2 = arith.constant 0 : index
    %3 = vector.load %arg2[%c0, %c0_1, %c0_2] : memref<1x32x128xf32, #tpu.memory_space<vmem>>, vector<1x32x128xf32>
    %4 = vector.shape_cast %3 : vector<1x32x128xf32> to vector<32x128xf32>
    %c0_3 = arith.constant 0 : index
    %c0_4 = arith.constant 0 : index
    %5 = vector.load %arg6[%c0_3, %c0_4] : memref<32x128xf32, #tpu.memory_space<vmem>>, vector<32x128xf32>
    %6 = arith.addf %5, %4 : vector<32x128xf32>
    %c0_5 = arith.constant 0 : index
    %c0_6 = arith.constant 0 : index
    %7 = vector.load %arg6[%c0_5, %c0_6] : memref<32x128xf32, #tpu.memory_space<vmem>>, vector<32x128xf32>
    tpu.vector_store %arg6[%c0_5, %c0_6], %6 {strides = array<i32>} : memref<32x128xf32, #tpu.memory_space<vmem>>, vector<32x128xf32>,
    %c0_7 = arith.constant 0 : index
    %c0_8 = arith.constant 0 : index
    %8 = vector.load %arg7[%c0_7, %c0_8] : memref<32x128xf32, #tpu.memory_space<vmem>>, vector<32x128xf32>
    %9 = arith.maximumf %8, %4 : vector<32x128xf32>
    %c0_9 = arith.constant 0 : index
    %c0_10 = arith.constant 0 : index
    %10 = vector.load %arg7[%c0_9, %c0_10] : memref<32x128xf32, #tpu.memory_space<vmem>>, vector<32x128xf32>
    tpu.vector_store %arg7[%c0_9, %c0_10], %9 {strides = array<i32>} : memref<32x128xf32, #tpu.memory_space<vmem>>, vector<32x128xf32>,
    %c1_i32 = arith.constant 1 : i32
    %11 = arith.cmpi eq, %arg1, %c1_i32 : i32
    %12 = arith.extui %11 : i1 to i32
    %c0_i32_11 = arith.constant 0 : i32
    %13 = arith.cmpi ne, %12, %c0_i32_11 : i32
    scf.if %13 {
      %c0_12 = arith.constant 0 : index
      %c0_13 = arith.constant 0 : index
      %14 = vector.load %arg6[%c0_12, %c0_13] : memref<32x128xf32, #tpu.memory_space<vmem>>, vector<32x128xf32>
      %cst = arith.constant dense<0.000000e+00> : vector<32xf32>
      %15 = vector.multi_reduction <add>, %14, %cst [1] : vector<32x128xf32> to vector<32xf32>
      %16 = vector.shape_cast %15 : vector<32xf32> to vector<32x1xf32>
      %cst_14 = arith.constant 3.906250e-03 : f32
      %17 = vector.broadcast %cst_14 : f32 to vector<32x1xf32>
      %18 = arith.mulf %16, %17 : vector<32x1xf32>
      %c0_15 = arith.constant 0 : index
      %c0_16 = arith.constant 0 : index
      %19 = vector.load %arg7[%c0_15, %c0_16] : memref<32x128xf32, #tpu.memory_space<vmem>>, vector<32x128xf32>
      %cst_17 = arith.constant dense<0xFF800000> : vector<32xf32>
      %20 = vector.multi_reduction <maximumf>, %19, %cst_17 [1] : vector<32x128xf32> to vector<32xf32>
      %21 = vector.shape_cast %20 : vector<32xf32> to vector<32x1xf32>
      %c0_18 = arith.constant 0 : index
      %c0_19 = arith.constant 0 : index
      %22 = vector.load %arg3[%c0_18, %c0_19] : memref<2x32xf32, #tpu.memory_space<vmem>>, vector<2x32xf32>
      %c0_20 = arith.constant 0 : index
      %c0_21 = arith.constant 0 : index
      %23 = vector.load %arg4[%c0_20, %c0_21] : memref<32x2xf32, #tpu.memory_space<vmem>>, vector<32x2xf32>
      %cst_22 = arith.constant dense<0.000000e+00> : vector<2x1xf32>
      %24 = tpu.matmul %22, %18, %cst_22 {dimension_numbers = #tpu.dot_dimension_numbers<[1], [0], [0], [1], [0, 0, 1, 1], [], []>} : vector<2x32xf32>, vector<32x1xf32>, vector<2x1xf32> -> vector<2x1xf32>
      %cst_23 = arith.constant 0.000000e+00 : f32
      %25 = vector.broadcast %cst_23 : f32 to vector<2x1xf32>
      %26 = arith.maximumf %24, %25 : vector<2x1xf32>
      %cst_24 = arith.constant dense<0.000000e+00> : vector<32x1xf32>
      %27 = tpu.matmul %23, %26, %cst_24 {dimension_numbers = #tpu.dot_dimension_numbers<[1], [0], [0], [1], [0, 0, 1, 1], [], []>} : vector<32x2xf32>, vector<2x1xf32>, vector<32x1xf32> -> vector<32x1xf32>
      %28 = arith.negf %27 : vector<32x1xf32>
      %29 = math.exp %28 : vector<32x1xf32>
      %cst_25 = arith.constant 1.000000e+00 : f32
      %30 = vector.broadcast %cst_25 : f32 to vector<32x1xf32>
      %31 = arith.addf %30, %29 : vector<32x1xf32>
      %32 = arith.divf %30, %31 : vector<32x1xf32>
      %cst_26 = arith.constant dense<0.000000e+00> : vector<2x1xf32>
      %33 = tpu.matmul %22, %21, %cst_26 {dimension_numbers = #tpu.dot_dimension_numbers<[1], [0], [0], [1], [0, 0, 1, 1], [], []>} : vector<2x32xf32>, vector<32x1xf32>, vector<2x1xf32> -> vector<2x1xf32>
      %cst_27 = arith.constant 0.000000e+00 : f32
      %34 = vector.broadcast %cst_27 : f32 to vector<2x1xf32>
      %35 = arith.maximumf %33, %34 : vector<2x1xf32>
      %cst_28 = arith.constant dense<0.000000e+00> : vector<32x1xf32>
      %36 = tpu.matmul %23, %35, %cst_28 {dimension_numbers = #tpu.dot_dimension_numbers<[1], [0], [0], [1], [0, 0, 1, 1], [], []>} : vector<32x2xf32>, vector<2x1xf32>, vector<32x1xf32> -> vector<32x1xf32>
      %37 = arith.negf %36 : vector<32x1xf32>
      %38 = math.exp %37 : vector<32x1xf32>
      %cst_29 = arith.constant 1.000000e+00 : f32
      %39 = vector.broadcast %cst_29 : f32 to vector<32x1xf32>
      %40 = arith.addf %39, %38 : vector<32x1xf32>
      %41 = arith.divf %39, %40 : vector<32x1xf32>
      %42 = arith.addf %32, %41 : vector<32x1xf32>
      %c0_30 = arith.constant 0 : index
      %c0_31 = arith.constant 0 : index
      %c0_32 = arith.constant 0 : index
      %43 = vector.load %arg5[%c0_30, %c0_31, %c0_32] : memref<1x32x1xf32, #tpu.memory_space<vmem>>, vector<1x32x1xf32>
      %44 = vector.shape_cast %43 : vector<1x32x1xf32> to vector<32x1xf32>
      %45 = vector.shape_cast %42 : vector<32x1xf32> to vector<1x32x1xf32>
      tpu.vector_store %arg5[%c0_30, %c0_31, %c0_32], %45 {strides = array<i32>} : memref<1x32x1xf32, #tpu.memory_space<vmem>>, vector<1x32x1xf32>,
    } else {
    }
    return
  }
  func.func @transform_0(%arg0: i32, %arg1: i32) -> (i32, i32, i32) {
    %c0_i32 = arith.constant 0 : i32
    %c0_i32_0 = arith.constant 0 : i32
    return %arg0, %c0_i32, %arg1 : i32, i32, i32
  }
  func.func @transform_1(%arg0: i32, %arg1: i32) -> (i32, i32) {
    %c0_i32 = arith.constant 0 : i32
    %c0_i32_0 = arith.constant 0 : i32
    %c0_i32_1 = arith.constant 0 : i32
    return %c0_i32, %c0_i32_0 : i32, i32
  }
  func.func @transform_2(%arg0: i32, %arg1: i32) -> (i32, i32) {
    %c0_i32 = arith.constant 0 : i32
    %c0_i32_0 = arith.constant 0 : i32
    %c0_i32_1 = arith.constant 0 : i32
    return %c0_i32, %c0_i32_0 : i32, i32
  }
  func.func @transform_3(%arg0: i32, %arg1: i32) -> (i32, i32, i32) {
    %c0_i32 = arith.constant 0 : i32
    %c0_i32_0 = arith.constant 0 : i32
    %c0_i32_1 = arith.constant 0 : i32
    return %arg0, %c0_i32, %c0_i32_0 : i32, i32, i32
  }
}

</mosaic_0001>

<llo_original>
// kernel: tpu_custom_call.1
$region0: #{tpu_custom_call.1}
  #allocation0 [shape = 'u32[]', space=smem, size = 0x4, offset = 0x4, fixed_abs, tag = 'smem constant byte address 0x4 - core index']
  #allocation1 [shape = 'u32[144,128]{1,0:T(1,128)}', space=vmem, size = 0x12000, scoped, tag = 'internal scratch']
  #allocation2 [shape = 'f32[32,128]{1,0:T(8,128)}', space=vmem, size = 0x4000, scoped, tag = 'scratch operand']
  #allocation3 [shape = 'f32[32,128]{1,0:T(8,128)}', space=vmem, size = 0x4000, scoped, tag = 'scratch operand']
  %s0 = inlined_call_operand.hbm [shape: f32[2,32,256], index: 0, kind: input, shape index: {}]
  %s1 = inlined_call_operand.vmem [shape: f32[2,32], index: 1, kind: input, shape index: {}]
  %s2 = inlined_call_operand.vmem [shape: f32[32,2], index: 2, kind: input, shape index: {}]
  %s3 = inlined_call_operand.vmem [shape: f32[2,32,1], index: 3, kind: output, shape index: {}]
  %s4 = sld [smem:[#allocation0]]
  $region57: #{tpu_custom_call.1} parent=0
    _
  %s6 = ssub.s32 1, %s4
  %s7 = scalar_select 0, %s6, %s4
  $region1: #{tpu_custom_call.1} parent=0
    #allocation4 [shape = 'u8[32768]{0}', space=vmem, size = 0x8000, scoped, tag = 'input window, operand 0']
    #allocation5 [shape = 's32[2]{0}', space=sflag, size = 0x8, scoped, tag = 'scoped memory for tpu_custom_call.1']
    %8 = vsyncpa [#allocation5], 0
    %s9 = scalar_lea.sflag [#allocation5], 1
    %10 = vsyncpa %s9, 0
    loop: start=0, step=1, limit=6
    $region2: #{tpu_custom_call.1} parent=1 // loop_pre_header
      _
    $region3: #{tpu_custom_call.1} parent=1 // loop_header
      %s12 = sphi 0, %s16
      %p13 = scmp.ge.s32.totalorder %s12, 6
      %s19 = sphi 0, %s31
      %s20 = sphi 0, %s27
      %s21 = sphi 0, %s19
      %s22 = sphi 0, %s20
      %s23 = sphi 0, %s21
      %s24 = sphi 0, %s22
      %s36 = sphi 0, %s38
      %s39 = sphi 0, %s36
      %s40 = sphi 0, %s39
      %s56 = sphi 0, %s40
      %s60 = sphi 0, %s60
      %s62 = sphi 0, %s60
      %s63 = sphi 0, %s62
      %s77 = sphi 0, %s63
      %s81 = sphi 0, %s81
      %s83 = sphi 0, %s81
      %s84 = sphi 0, %s83
      %s98 = sphi 0, %s84
      %s104 = sphi 0, %s106
      %s107 = sphi 0, %s104
      %s108 = sphi 0, %s107
      %s124 = sphi 0, %s108
    $region4: #{tpu_custom_call.1} parent=1 // loop_header_branch
      %15 = sbr.rel (%p13) target = $region8
    $region5: #{tpu_custom_call.1} parent=1 // loop_body
      %s17 = ssub.s32 %s12, 1
      %s18 = ssub.s32 %s12, 2
      %s25 = sadd.s32 1, %s20
      %p26 = scmp.ge.s32.totalorder %s25, 2
      %s27 = scalar_select %p26, 0, %s25
      %s28 = sadd.s32 1, %s19
      %s29 = scalar_select %p26, %s28, %s19
      %p30 = scmp.ge.s32.totalorder %s29, 2
      %s31 = scalar_select %p30, 0, %s29
      %s32 = ssub.s32 %s19, %s31
      %s33 = ssub.s32 %s20, %s27
      %s34 = sor.u32 %s32, %s33
      %p35 = scmp.eq.s32.totalorder %s34, 0
      %s37 = sadd.s32 %s36, 1
      %s38 = scalar_select %p35, %s36, %s37
      %p41 = pneg %p35
      %p42 = scmp.eq.s32.totalorder %s12, 3
      %p43 = por %p41, %p42
      %p44 = scmp.ne.s32.totalorder %s36, %s39
      %p45 = scmp.eq.s32.totalorder %s12, 0
      %p46 = por %p44, %p45
      %p47 = scmp.ne.s32.totalorder %s36, %s39
      %p48 = scmp.eq.s32.totalorder %s17, 3
      %p49 = por %p47, %p48
      %p50 = scmp.ne.s32.totalorder %s39, %s40
      %p51 = scmp.eq.s32.totalorder %s17, 0
      %p52 = por %p50, %p51
      %p53 = scmp.ne.s32.totalorder %s39, %s40
      %p54 = scmp.eq.s32.totalorder %s18, 3
      %p55 = por %p53, %p54
      %p57 = scmp.ne.s32.totalorder %s40, %s56
      %p58 = scmp.eq.s32.totalorder %s18, 0
      %p59 = por %p57, %p58
      %s61 = sadd.s32 %s60, 1
      %p64 = scmp.eq.s32.totalorder %s12, 3
      %p65 = scmp.ne.s32.totalorder %s60, %s62
      %p66 = scmp.eq.s32.totalorder %s12, 0
      %p67 = por %p65, %p66
      %p68 = scmp.ne.s32.totalorder %s60, %s62
      %p69 = scmp.eq.s32.totalorder %s17, 3
      %p70 = por %p68, %p69
      %p71 = scmp.ne.s32.totalorder %s62, %s63
      %p72 = scmp.eq.s32.totalorder %s17, 0
      %p73 = por %p71, %p72
      %p74 = scmp.ne.s32.totalorder %s62, %s63
      %p75 = scmp.eq.s32.totalorder %s18, 3
      %p76 = por %p74, %p75
      %p78 = scmp.ne.s32.totalorder %s63, %s77
      %p79 = scmp.eq.s32.totalorder %s18, 0
      %p80 = por %p78, %p79
      %s82 = sadd.s32 %s81, 1
      %p85 = scmp.eq.s32.totalorder %s12, 3
      %p86 = scmp.ne.s32.totalorder %s81, %s83
      %p87 = scmp.eq.s32.totalorder %s12, 0
      %p88 = por %p86, %p87
      %p89 = scmp.ne.s32.totalorder %s81, %s83
      %p90 = scmp.eq.s32.totalorder %s17, 3
      %p91 = por %p89, %p90
      %p92 = scmp.ne.s32.totalorder %s83, %s84
      %p93 = scmp.eq.s32.totalorder %s17, 0
      %p94 = por %p92, %p93
      %p95 = scmp.ne.s32.totalorder %s83, %s84
      %p96 = scmp.eq.s32.totalorder %s18, 3
      %p97 = por %p95, %p96
      %p99 = scmp.ne.s32.totalorder %s84, %s98
      %p100 = scmp.eq.s32.totalorder %s18, 0
      %p101 = por %p99, %p100
      %s102 = ssub.s32 %s19, %s31
      %p103 = scmp.eq.s32.totalorder %s102, 0
      %s105 = sadd.s32 %s104, 1
      %s106 = scalar_select %p103, %s104, %s105
      %p109 = pneg %p103
      %p110 = scmp.eq.s32.totalorder %s12, 3
      %p111 = por %p109, %p110
      %p112 = scmp.ne.s32.totalorder %s104, %s107
      %p113 = scmp.eq.s32.totalorder %s12, 0
      %p114 = por %p112, %p113
      %p115 = scmp.ne.s32.totalorder %s104, %s107
      %p116 = scmp.eq.s32.totalorder %s17, 3
      %p117 = por %p115, %p116
      %p118 = scmp.ne.s32.totalorder %s107, %s108
      %p119 = scmp.eq.s32.totalorder %s17, 0
      %p120 = por %p118, %p119
      %p121 = scmp.ne.s32.totalorder %s107, %s108
      %p122 = scmp.eq.s32.totalorder %s18, 3
      %p123 = por %p121, %p122
      %p125 = scmp.ne.s32.totalorder %s108, %s124
      %p126 = scmp.eq.s32.totalorder %s18, 0
      %p127 = por %p125, %p126
      %p128 = scmp.le.s32.totalorder 1, %s12
      %p129 = scmp.lt.s32.totalorder %s12, 5
      %p130 = pnand %p128, %p129
      %p131 = pneg %p130
      // Predicated region
      $region9: #{tpu_custom_call.1} parent=5 // pred_check
        _
      $region10: #{tpu_custom_call.1} parent=5 // pred_check_branch
        %133 = sbr.rel (%p130) target = $region12
      $region11: #{tpu_custom_call.1} parent=5 // pred_region
        %s134 = ssub.s32 %s12, 1
        // Predicated region
        $region13: #{tpu_custom_call.1} parent=11 // pred_check
          %p135 = pneg %p73
        $region14: #{tpu_custom_call.1} parent=11 // pred_check_branch
          %137 = sbr.rel (%p135) target = $region16
        $region15: #{tpu_custom_call.1} parent=11 // pred_region
          _
        $region16: #{tpu_custom_call.1} parent=11 // pred_fallthru
          _
        // Predicated region
        $region17: #{tpu_custom_call.1} parent=11 // pred_check
          %p138 = pneg %p94
        $region18: #{tpu_custom_call.1} parent=11 // pred_check_branch
          %140 = sbr.rel (%p138) target = $region20
        $region19: #{tpu_custom_call.1} parent=11 // pred_region
          _
        $region20: #{tpu_custom_call.1} parent=11 // pred_fallthru
          _
      $region12: #{tpu_custom_call.1} parent=5 // pred_fallthru
        _
      %p141 = scmp.lt.s32.totalorder %s12, 4
      // Predicated region
      $region21: #{tpu_custom_call.1} parent=5 // pred_check
        %p142 = pneg %p141
      $region22: #{tpu_custom_call.1} parent=5 // pred_check_branch
        %144 = sbr.rel (%p142) target = $region24
      $region23: #{tpu_custom_call.1} parent=5 // pred_region
        // Predicated region
        $region25: #{tpu_custom_call.1} parent=23 // pred_check
          %p145 = pneg %p46
        $region26: #{tpu_custom_call.1} parent=23 // pred_check_branch
          %147 = sbr.rel (%p145) target = $region28
        $region27: #{tpu_custom_call.1} parent=23 // pred_region
          %s148 = sand.u32 %s36, 1
          %s149 = scalar_lea.sflag [#allocation5], %s148
          %s150 = sand.u32 %s36, 1
          %s151 = smul.addr %s150, 32
          %s152 = scalar_lea.vmem [#allocation4], %s151
          %s154 = ssub.s32 512, 512
          %155 = vsyncadd %s149, %s154
          %s156 = smul.addr %s19, 8
          %s157 = sadd.s32 %s20, %s156
          %s158 = smul.addr %s157, 128
          %s159 = scalar_lea.hbm %s0, %s158
          %s160 = sshll.u32 %s152, 4
          %s161 = int_to_ptr.vmem [resolvable:$true] %s160
          %166 = dma.hbm_to_vmem [thread:$0]  %s159, 512, %s161, %s149, 256, 128, 8
        $region28: #{tpu_custom_call.1} parent=23 // pred_fallthru
          _
      $region24: #{tpu_custom_call.1} parent=5 // pred_fallthru
        _
      %p167 = scmp.le.s32.totalorder 1, %s12
      %p168 = scmp.lt.s32.totalorder %s12, 5
      %p169 = pnand %p167, %p168
      %p170 = pneg %p169
      // Predicated region
      $region29: #{tpu_custom_call.1} parent=5 // pred_check
        _
      $region30: #{tpu_custom_call.1} parent=5 // pred_check_branch
        %172 = sbr.rel (%p169) target = $region32
      $region31: #{tpu_custom_call.1} parent=5 // pred_region
        %s173 = ssub.s32 %s12, 1
        %s174 = sand.u32 %s39, 1
        %s175 = scalar_lea.sflag [#allocation5], %s174
        %s176 = sand.u32 %s39, 1
        %s177 = smul.addr %s176, 32
        %s178 = scalar_lea.vmem [#allocation4], %s177
        // Predicated region
        $region33: #{tpu_custom_call.1} parent=31 // pred_check
          %p179 = pneg %p52
        $region34: #{tpu_custom_call.1} parent=31 // pred_check_branch
          %181 = sbr.rel (%p179) target = $region36
        $region35: #{tpu_custom_call.1} parent=31 // pred_region
          %182 = dma.done %s175, 512
        $region36: #{tpu_custom_call.1} parent=31 // pred_fallthru
          _
        %s183 = sand.u32 %s39, 1
        %s184 = scalar_lea.sflag [#allocation5], %s183
        %s185 = sand.u32 %s39, 1
        %s186 = smul.addr %s185, 32
        %s187 = scalar_lea.vmem [#allocation4], %s186
        %p188 = pneg %p52
        %p189 = pneg %p49
        %p190 = pneg %p73
        %p191 = pneg %p70
        %p192 = pneg %p94
        %p193 = pneg %p91
        %p194 = pneg %p120
        %p195 = pneg %p117
        %p196 = scmp.lt.s32.totalorder %s21, 1
        %s197 = scalar_select %p196, %s21, 1
        %s198 = smul.addr %s197, 4
        %s199 = smul.addr %s198, 8
        %s200 = scalar_lea.vmem %s3, %s199
        %p201 = scmp.lt.s32.totalorder %s21, 1
        %s202 = scalar_select %p201, %s21, 1
        %s203 = smul.addr %s202, 4
        %s204 = smul.addr %s203, 8
        %s205 = scalar_lea.vmem %s3, %s204
        %p206 = scmp.eq.s32.totalorder %s22, 0
        // Predicated region
        $region37: #{tpu_custom_call.1} parent=31 // pred_check
          %p207 = pneg %p206
        $region38: #{tpu_custom_call.1} parent=31 // pred_check_branch
          %209 = sbr.rel (%p207) target = $region40
        $region39: #{tpu_custom_call.1} parent=31 // pred_region
          %210 = vst [vmem:[#allocation2] sm:$0xff] 0.0
          %211 = vst [vmem:[#allocation2 + $0x8] sm:$0xff] 0.0
          %212 = vst [vmem:[#allocation2 + $0x10] sm:$0xff] 0.0
          %213 = vst [vmem:[#allocation2 + $0x18] sm:$0xff] 0.0
          %214 = vst [vmem:[#allocation3] sm:$0xff] -inf
          %215 = vst [vmem:[#allocation3 + $0x8] sm:$0xff] -inf
          %216 = vst [vmem:[#allocation3 + $0x10] sm:$0xff] -inf
          %217 = vst [vmem:[#allocation3 + $0x18] sm:$0xff] -inf
        $region40: #{tpu_custom_call.1} parent=31 // pred_fallthru
          _
        %v218 = vld [vmem:[%s178] sm:$0xff]
        %v219 = vld [vmem:[%s178 + $0x8] sm:$0xff]
        %v220 = vld [vmem:[%s178 + $0x10] sm:$0xff]
        %v221 = vld [vmem:[%s178 + $0x18] sm:$0xff]
        %v222 = vld [vmem:[#allocation2] sm:$0xff]
        %v223 = vld [vmem:[#allocation2 + $0x8] sm:$0xff]
        %v224 = vld [vmem:[#allocation2 + $0x10] sm:$0xff]
        %v225 = vld [vmem:[#allocation2 + $0x18] sm:$0xff]
        %v226 = vadd.f32 %v222, %v218
        %v227 = vadd.f32 %v223, %v219
        %v228 = vadd.f32 %v224, %v220
        %v229 = vadd.f32 %v225, %v221
        %230 = vst [vmem:[#allocation2] sm:$0xff] %v226
        %231 = vst [vmem:[#allocation2 + $0x8] sm:$0xff] %v227
        %232 = vst [vmem:[#allocation2 + $0x10] sm:$0xff] %v228
        %233 = vst [vmem:[#allocation2 + $0x18] sm:$0xff] %v229
        %v234 = vld [vmem:[#allocation3] sm:$0xff]
        %v235 = vld [vmem:[#allocation3 + $0x8] sm:$0xff]
        %v236 = vld [vmem:[#allocation3 + $0x10] sm:$0xff]
        %v237 = vld [vmem:[#allocation3 + $0x18] sm:$0xff]
        %v238 = vmax.f32 %v234, %v218
        %v239 = vmax.f32 %v235, %v219
        %v240 = vmax.f32 %v236, %v220
        %v241 = vmax.f32 %v237, %v221
        %242 = vst [vmem:[#allocation3] sm:$0xff] %v238
        %243 = vst [vmem:[#allocation3 + $0x8] sm:$0xff] %v239
        %244 = vst [vmem:[#allocation3 + $0x10] sm:$0xff] %v240
        %245 = vst [vmem:[#allocation3 + $0x18] sm:$0xff] %v241
        %p246 = scmp.eq.s32.totalorder %s22, 1
        // Predicated region
        $region41: #{tpu_custom_call.1} parent=31 // pred_check
          %p247 = pneg %p246
        $region42: #{tpu_custom_call.1} parent=31 // pred_check_branch
          %249 = sbr.rel (%p247) target = $region44
        $region43: #{tpu_custom_call.1} parent=31 // pred_region
          %v250 = vld [vmem:[#allocation2] sm:$0xff]
          %v251 = vld [vmem:[#allocation2 + $0x8] sm:$0xff]
          %v252 = vld [vmem:[#allocation2 + $0x10] sm:$0xff]
          %v253 = vld [vmem:[#allocation2 + $0x18] sm:$0xff]
          %254 = vadd.xlane.f32.xlu0 %v250
          %v255 = vpop.xlane.xlu0 %254
          %256 = vadd.xlane.f32.xlu0 %v251
          %v257 = vpop.xlane.xlu0 %256
          %258 = vadd.xlane.f32.xlu0 %v252
          %v259 = vpop.xlane.xlu0 %258
          %260 = vadd.xlane.f32.xlu0 %v253
          %v261 = vpop.xlane.xlu0 %260
          %v262 = vmul.f32 %v255, 0.00390625
          %v263 = vmul.f32 %v257, 0.00390625
          %v264 = vmul.f32 %v259, 0.00390625
          %v265 = vmul.f32 %v261, 0.00390625
          %v266 = vld [vmem:[#allocation3] sm:$0xff]
          %v267 = vld [vmem:[#allocation3 + $0x8] sm:$0xff]
          %v268 = vld [vmem:[#allocation3 + $0x10] sm:$0xff]
          %v269 = vld [vmem:[#allocation3 + $0x18] sm:$0xff]
          %270 = vmax.xlane.f32.xlu0 %v266
          %v271 = vpop.xlane.xlu0 %270
          %272 = vmax.xlane.f32.xlu0 %v267
          %v273 = vpop.xlane.xlu0 %272
          %274 = vmax.xlane.f32.xlu0 %v268
          %v275 = vpop.xlane.xlu0 %274
          %276 = vmax.xlane.f32.xlu0 %v269
          %v277 = vpop.xlane.xlu0 %276
          %v278 = vld [vmem:[%s1] sm:$0x3]
          %v279 = vld [vmem:[%s2] sm:$0xff]
          %v280 = vld [vmem:[%s2 + $0x8] sm:$0xff]
          %v281 = vld [vmem:[%s2 + $0x10] sm:$0xff]
          %v282 = vld [vmem:[%s2 + $0x18] sm:$0xff]
          %vm283 = vcmask 261120
          %v285 = vsel %vm283, %v278, 0
          %287 = vmatprep.subr.mxu0 0.0
          %288 = vmatpush1.msra.mxu0 0.0
          %289 = vmatprep.subr.mxu0 0.0
          %290 = vmatpush1.msra.mxu0 0.0
          %291 = vmatprep.subr.mxu0 0.0
          %292 = vmatpush1.msra.mxu0 0.0
          %293 = vmatprep.subr.mxu0 0.0
          %294 = vmatpush1.msra.mxu0 0.0
          %295 = vmatprep.subr.mxu0 0.0
          %296 = vmatpush1.msra.mxu0 0.0
          %297 = vmatprep.subr.mxu0 0.0
          %298 = vmatpush1.msra.mxu0 0.0
          %299 = vmatprep.subr.mxu0 0.0
          %300 = vmatpush1.msra.mxu0 0.0
          %301 = vmatprep.subr.mxu0 0.0
          %302 = vmatpush1.msra.mxu0 0.0
          %303 = vmatprep.subr.mxu0 0.0
          %304 = vmatpush1.msra.mxu0 0.0
          %305 = vmatprep.subr.mxu0 0.0
          %306 = vmatpush1.msra.mxu0 0.0
          %307 = vmatprep.subr.mxu0 0.0
          %308 = vmatpush1.msra.mxu0 0.0
          %309 = vmatprep.subr.mxu0 0.0
          %310 = vmatpush1.msra.mxu0 0.0
          %311 = vmatprep.subr.mxu0 0.0
          %312 = vmatpush1.msra.mxu0 %v265
          %313 = vmatprep.subr.mxu0 0.0
          %314 = vmatpush1.msra.mxu0 %v264
          %315 = vmatprep.subr.mxu0 0.0
          %316 = vmatpush1.msra.mxu0 %v263
          %317 = vmatprep.subr.mxu0 0.0
          %318 = vmatpush1.msra.mxu0 %v262
          %319 = vmatprep.subr.mxu0 0.0
          %320 = vmatpush2.msra.mxu0 0.0
          %321 = vmatprep.subr.mxu0 0.0
          %322 = vmatpush2.msra.mxu0 0.0
          %323 = vmatprep.subr.mxu0 0.0
          %324 = vmatpush2.msra.mxu0 0.0
          %325 = vmatprep.subr.mxu0 0.0
          %326 = vmatpush2.msra.mxu0 0.0
          %327 = vmatprep.subr.mxu0 0.0
          %328 = vmatpush2.msra.mxu0 0.0
          %329 = vmatprep.subr.mxu0 0.0
          %330 = vmatpush2.msra.mxu0 0.0
          %331 = vmatprep.subr.mxu0 0.0
          %332 = vmatpush2.msra.mxu0 0.0
          %333 = vmatprep.subr.mxu0 0.0
          %334 = vmatpush2.msra.mxu0 0.0
          %335 = vmatprep.subr.mxu0 0.0
          %336 = vmatpush2.msra.mxu0 0.0
          %337 = vmatprep.subr.mxu0 0.0
          %338 = vmatpush2.msra.mxu0 0.0
          %339 = vmatprep.subr.mxu0 0.0
          %340 = vmatpush2.msra.mxu0 0.0
          %341 = vmatprep.subr.mxu0 0.0
          %342 = vmatpush2.msra.mxu0 0.0
          %343 = vmatprep.subr.mxu0 0.0
          %344 = vmatpush2.msra.mxu0 0.0
          %345 = vmatprep.subr.mxu0 0.0
          %346 = vmatpush2.msra.mxu0 0.0
          %347 = vmatprep.subr.mxu0 0.0
          %348 = vmatpush2.msra.mxu0 0.0
          %349 = vmatprep.subr.mxu0 0.0
          %350 = vmatpush2.msra.mxu0 0.0
          %351 = vmatprep.mubr.f32.mxu0 0.0
          %352 = vmatmul.mubr.f32.gmra.mxu0 %v285
          %v353 = vpop.f32.mrf.mxu0
          %v354 = vadd.f32 0.0, %v353
          %v355 = vpop.f32.mrf.mxu0
          %356 = vdwg.mxu0
          %v357 = vmax.f32 %v354, 0.0
          %vm358 = vcmask 15360
          %v360 = vsel %vm358, %v279, 0
          %v363 = vsel %vm358, %v280, 0
          %v366 = vsel %vm358, %v281, 0
          %v369 = vsel %vm358, %v282, 0
          %vm371 = vcmask 1041408
          %v373 = vsel %vm371, %v357, 0
          %375 = vmatprep.subr.mxu0 0.0
          %376 = vmatpush1.msra.mxu0 0.0
          %377 = vmatprep.subr.mxu0 0.0
          %378 = vmatpush1.msra.mxu0 0.0
          %379 = vmatprep.subr.mxu0 0.0
          %380 = vmatpush1.msra.mxu0 0.0
          %381 = vmatprep.subr.mxu0 0.0
          %382 = vmatpush1.msra.mxu0 0.0
          %383 = vmatprep.subr.mxu0 0.0
          %384 = vmatpush1.msra.mxu0 0.0
          %385 = vmatprep.subr.mxu0 0.0
          %386 = vmatpush1.msra.mxu0 0.0
          %387 = vmatprep.subr.mxu0 0.0
          %388 = vmatpush1.msra.mxu0 0.0
          %389 = vmatprep.subr.mxu0 0.0
          %390 = vmatpush1.msra.mxu0 0.0
          %391 = vmatprep.subr.mxu0 0.0
          %392 = vmatpush1.msra.mxu0 0.0
          %393 = vmatprep.subr.mxu0 0.0
          %394 = vmatpush1.msra.mxu0 0.0
          %395 = vmatprep.subr.mxu0 0.0
          %396 = vmatpush1.msra.mxu0 0.0
          %397 = vmatprep.subr.mxu0 0.0
          %398 = vmatpush1.msra.mxu0 0.0
          %399 = vmatprep.subr.mxu0 0.0
          %400 = vmatpush1.msra.mxu0 0.0
          %401 = vmatprep.subr.mxu0 0.0
          %402 = vmatpush1.msra.mxu0 0.0
          %403 = vmatprep.subr.mxu0 0.0
          %404 = vmatpush1.msra.mxu0 0.0
          %405 = vmatprep.subr.mxu0 0.0
          %406 = vmatpush1.msra.mxu0 %v373
          %407 = vmatprep.subr.mxu0 0.0
          %408 = vmatpush2.msra.mxu0 0.0
          %409 = vmatprep.subr.mxu0 0.0
          %410 = vmatpush2.msra.mxu0 0.0
          %411 = vmatprep.subr.mxu0 0.0
          %412 = vmatpush2.msra.mxu0 0.0
          %413 = vmatprep.subr.mxu0 0.0
          %414 = vmatpush2.msra.mxu0 0.0
          %415 = vmatprep.subr.mxu0 0.0
          %416 = vmatpush2.msra.mxu0 0.0
          %417 = vmatprep.subr.mxu0 0.0
          %418 = vmatpush2.msra.mxu0 0.0
          %419 = vmatprep.subr.mxu0 0.0
          %420 = vmatpush2.msra.mxu0 0.0
          %421 = vmatprep.subr.mxu0 0.0
          %422 = vmatpush2.msra.mxu0 0.0
          %423 = vmatprep.subr.mxu0 0.0
          %424 = vmatpush2.msra.mxu0 0.0
          %425 = vmatprep.subr.mxu0 0.0
          %426 = vmatpush2.msra.mxu0 0.0
          %427 = vmatprep.subr.mxu0 0.0
          %428 = vmatpush2.msra.mxu0 0.0
          %429 = vmatprep.subr.mxu0 0.0
          %430 = vmatpush2.msra.mxu0 0.0
          %431 = vmatprep.subr.mxu0 0.0
          %432 = vmatpush2.msra.mxu0 0.0
          %433 = vmatprep.subr.mxu0 0.0
          %434 = vmatpush2.msra.mxu0 0.0
          %435 = vmatprep.subr.mxu0 0.0
          %436 = vmatpush2.msra.mxu0 0.0
          %437 = vmatprep.subr.mxu0 0.0
          %438 = vmatpush2.msra.mxu0 0.0
          %439 = vmatprep.mubr.f32.mxu0 0.0
          %440 = vmatmul.mubr.f32.gmra.mxu0 %v360
          %v441 = vpop.f32.mrf.mxu0
          %v442 = vadd.f32 0.0, %v441
          %v443 = vpop.f32.mrf.mxu0
          %444 = vmatprep.mubr.f32.mxu0 0.0
          %445 = vmatmul.mubr.f32.gmra.mxu0 %v363
          %v446 = vpop.f32.mrf.mxu0
          %v447 = vadd.f32 0.0, %v446
          %v448 = vpop.f32.mrf.mxu0
          %449 = vmatprep.mubr.f32.mxu0 0.0
          %450 = vmatmul.mubr.f32.gmra.mxu0 %v366
          %v451 = vpop.f32.mrf.mxu0
          %v452 = vadd.f32 0.0, %v451
          %v453 = vpop.f32.mrf.mxu0
          %454 = vmatprep.mubr.f32.mxu0 0.0
          %455 = vmatmul.mubr.f32.gmra.mxu0 %v369
          %v456 = vpop.f32.mrf.mxu0
          %v457 = vadd.f32 0.0, %v456
          %v458 = vpop.f32.mrf.mxu0
          %459 = vdwg.mxu0
          %v460 = vxor.u32 %v442, 2147483648
          %v461 = vxor.u32 %v447, 2147483648
          %v462 = vxor.u32 %v452, 2147483648
          %v463 = vxor.u32 %v457, 2147483648
          %v464 = vmul.f32 %v460, 1.442695
          %v465 = vpow.pop %v464
          %v466 = vmul.f32 %v461, 1.442695
          %v467 = vpow.pop %v466
          %v468 = vmul.f32 %v462, 1.442695
          %v469 = vpow.pop %v468
          %v470 = vmul.f32 %v463, 1.442695
          %v471 = vpow.pop %v470
          %v472 = vadd.f32 %v465, 1.0
          %v473 = vadd.f32 %v467, 1.0
          %v474 = vadd.f32 %v469, 1.0
          %v475 = vadd.f32 %v471, 1.0
          %v476 = vrcp.pop %v472
          %v477 = vmul.f32 1.0, %v476
          %v478 = vrcp.pop %v473
          %v479 = vmul.f32 1.0, %v478
          %v480 = vrcp.pop %v474
          %v481 = vmul.f32 1.0, %v480
          %v482 = vrcp.pop %v475
          %v483 = vmul.f32 1.0, %v482
          %484 = vmatprep.subr.mxu0 0.0
          %485 = vmatpush1.msra.mxu0 0.0
          %486 = vmatprep.subr.mxu0 0.0
          %487 = vmatpush1.msra.mxu0 0.0
          %488 = vmatprep.subr.mxu0 0.0
          %489 = vmatpush1.msra.mxu0 0.0
          %490 = vmatprep.subr.mxu0 0.0
          %491 = vmatpush1.msra.mxu0 0.0
          %492 = vmatprep.subr.mxu0 0.0
          %493 = vmatpush1.msra.mxu0 0.0
          %494 = vmatprep.subr.mxu0 0.0
          %495 = vmatpush1.msra.mxu0 0.0
          %496 = vmatprep.subr.mxu0 0.0
          %497 = vmatpush1.msra.mxu0 0.0
          %498 = vmatprep.subr.mxu0 0.0
          %499 = vmatpush1.msra.mxu0 0.0
          %500 = vmatprep.subr.mxu0 0.0
          %501 = vmatpush1.msra.mxu0 0.0
          %502 = vmatprep.subr.mxu0 0.0
          %503 = vmatpush1.msra.mxu0 0.0
          %504 = vmatprep.subr.mxu0 0.0
          %505 = vmatpush1.msra.mxu0 0.0
          %506 = vmatprep.subr.mxu0 0.0
          %507 = vmatpush1.msra.mxu0 0.0
          %508 = vmatprep.subr.mxu0 0.0
          %509 = vmatpush1.msra.mxu0 %v277
          %510 = vmatprep.subr.mxu0 0.0
          %511 = vmatpush1.msra.mxu0 %v275
          %512 = vmatprep.subr.mxu0 0.0
          %513 = vmatpush1.msra.mxu0 %v273
          %514 = vmatprep.subr.mxu0 0.0
          %515 = vmatpush1.msra.mxu0 %v271
          %516 = vmatprep.subr.mxu0 0.0
          %517 = vmatpush2.msra.mxu0 0.0
          %518 = vmatprep.subr.mxu0 0.0
          %519 = vmatpush2.msra.mxu0 0.0
          %520 = vmatprep.subr.mxu0 0.0
          %521 = vmatpush2.msra.mxu0 0.0
          %522 = vmatprep.subr.mxu0 0.0
          %523 = vmatpush2.msra.mxu0 0.0
          %524 = vmatprep.subr.mxu0 0.0
          %525 = vmatpush2.msra.mxu0 0.0
          %526 = vmatprep.subr.mxu0 0.0
          %527 = vmatpush2.msra.mxu0 0.0
          %528 = vmatprep.subr.mxu0 0.0
          %529 = vmatpush2.msra.mxu0 0.0
          %530 = vmatprep.subr.mxu0 0.0
          %531 = vmatpush2.msra.mxu0 0.0
          %532 = vmatprep.subr.mxu0 0.0
          %533 = vmatpush2.msra.mxu0 0.0
          %534 = vmatprep.subr.mxu0 0.0
          %535 = vmatpush2.msra.mxu0 0.0
          %536 = vmatprep.subr.mxu0 0.0
          %537 = vmatpush2.msra.mxu0 0.0
          %538 = vmatprep.subr.mxu0 0.0
          %539 = vmatpush2.msra.mxu0 0.0
          %540 = vmatprep.subr.mxu0 0.0
          %541 = vmatpush2.msra.mxu0 0.0
          %542 = vmatprep.subr.mxu0 0.0
          %543 = vmatpush2.msra.mxu0 0.0
          %544 = vmatprep.subr.mxu0 0.0
          %545 = vmatpush2.msra.mxu0 0.0
          %546 = vmatprep.subr.mxu0 0.0
          %547 = vmatpush2.msra.mxu0 0.0
          %548 = vmatprep.mubr.f32.mxu0 0.0
          %549 = vmatmul.mubr.f32.gmra.mxu0 %v285
          %v550 = vpop.f32.mrf.mxu0
          %v551 = vadd.f32 0.0, %v550
          %v552 = vpop.f32.mrf.mxu0
          %553 = vdwg.mxu0
          %v554 = vmax.f32 %v551, 0.0
          %v556 = vsel %vm371, %v554, 0
          %558 = vmatprep.subr.mxu0 0.0
          %559 = vmatpush1.msra.mxu0 0.0
          %560 = vmatprep.subr.mxu0 0.0
          %561 = vmatpush1.msra.mxu0 0.0
          %562 = vmatprep.subr.mxu0 0.0
          %563 = vmatpush1.msra.mxu0 0.0
          %564 = vmatprep.subr.mxu0 0.0
          %565 = vmatpush1.msra.mxu0 0.0
          %566 = vmatprep.subr.mxu0 0.0
          %567 = vmatpush1.msra.mxu0 0.0
          %568 = vmatprep.subr.mxu0 0.0
          %569 = vmatpush1.msra.mxu0 0.0
          %570 = vmatprep.subr.mxu0 0.0
          %571 = vmatpush1.msra.mxu0 0.0
          %572 = vmatprep.subr.mxu0 0.0
          %573 = vmatpush1.msra.mxu0 0.0
          %574 = vmatprep.subr.mxu0 0.0
          %575 = vmatpush1.msra.mxu0 0.0
          %576 = vmatprep.subr.mxu0 0.0
          %577 = vmatpush1.msra.mxu0 0.0
          %578 = vmatprep.subr.mxu0 0.0
          %579 = vmatpush1.msra.mxu0 0.0
          %580 = vmatprep.subr.mxu0 0.0
          %581 = vmatpush1.msra.mxu0 0.0
          %582 = vmatprep.subr.mxu0 0.0
          %583 = vmatpush1.msra.mxu0 0.0
          %584 = vmatprep.subr.mxu0 0.0
          %585 = vmatpush1.msra.mxu0 0.0
          %586 = vmatprep.subr.mxu0 0.0
          %587 = vmatpush1.msra.mxu0 0.0
          %588 = vmatprep.subr.mxu0 0.0
          %589 = vmatpush1.msra.mxu0 %v556
          %590 = vmatprep.subr.mxu0 0.0
          %591 = vmatpush2.msra.mxu0 0.0
          %592 = vmatprep.subr.mxu0 0.0
          %593 = vmatpush2.msra.mxu0 0.0
          %594 = vmatprep.subr.mxu0 0.0
          %595 = vmatpush2.msra.mxu0 0.0
          %596 = vmatprep.subr.mxu0 0.0
          %597 = vmatpush2.msra.mxu0 0.0
          %598 = vmatprep.subr.mxu0 0.0
          %599 = vmatpush2.msra.mxu0 0.0
          %600 = vmatprep.subr.mxu0 0.0
          %601 = vmatpush2.msra.mxu0 0.0
          %602 = vmatprep.subr.mxu0 0.0
          %603 = vmatpush2.msra.mxu0 0.0
          %604 = vmatprep.subr.mxu0 0.0
          %605 = vmatpush2.msra.mxu0 0.0
          %606 = vmatprep.subr.mxu0 0.0
          %607 = vmatpush2.msra.mxu0 0.0
          %608 = vmatprep.subr.mxu0 0.0
          %609 = vmatpush2.msra.mxu0 0.0
          %610 = vmatprep.subr.mxu0 0.0
          %611 = vmatpush2.msra.mxu0 0.0
          %612 = vmatprep.subr.mxu0 0.0
          %613 = vmatpush2.msra.mxu0 0.0
          %614 = vmatprep.subr.mxu0 0.0
          %615 = vmatpush2.msra.mxu0 0.0
          %616 = vmatprep.subr.mxu0 0.0
          %617 = vmatpush2.msra.mxu0 0.0
          %618 = vmatprep.subr.mxu0 0.0
          %619 = vmatpush2.msra.mxu0 0.0
          %620 = vmatprep.subr.mxu0 0.0
          %621 = vmatpush2.msra.mxu0 0.0
          %622 = vmatprep.mubr.f32.mxu0 0.0
          %623 = vmatmul.mubr.f32.gmra.mxu0 %v360
          %v624 = vpop.f32.mrf.mxu0
          %v625 = vadd.f32 0.0, %v624
          %v626 = vpop.f32.mrf.mxu0
          %627 = vmatprep.mubr.f32.mxu0 0.0
          %628 = vmatmul.mubr.f32.gmra.mxu0 %v363
          %v629 = vpop.f32.mrf.mxu0
          %v630 = vadd.f32 0.0, %v629
          %v631 = vpop.f32.mrf.mxu0
          %632 = vmatprep.mubr.f32.mxu0 0.0
          %633 = vmatmul.mubr.f32.gmra.mxu0 %v366
          %v634 = vpop.f32.mrf.mxu0
          %v635 = vadd.f32 0.0, %v634
          %v636 = vpop.f32.mrf.mxu0
          %637 = vmatprep.mubr.f32.mxu0 0.0
          %638 = vmatmul.mubr.f32.gmra.mxu0 %v369
          %v639 = vpop.f32.mrf.mxu0
          %v640 = vadd.f32 0.0, %v639
          %v641 = vpop.f32.mrf.mxu0
          %642 = vdwg.mxu0
          %v643 = vxor.u32 %v625, 2147483648
          %v644 = vxor.u32 %v630, 2147483648
          %v645 = vxor.u32 %v635, 2147483648
          %v646 = vxor.u32 %v640, 2147483648
          %v647 = vmul.f32 %v643, 1.442695
          %v648 = vpow.pop %v647
          %v649 = vmul.f32 %v644, 1.442695
          %v650 = vpow.pop %v649
          %v651 = vmul.f32 %v645, 1.442695
          %v652 = vpow.pop %v651
          %v653 = vmul.f32 %v646, 1.442695
          %v654 = vpow.pop %v653
          %v655 = vadd.f32 %v648, 1.0
          %v656 = vadd.f32 %v650, 1.0
          %v657 = vadd.f32 %v652, 1.0
          %v658 = vadd.f32 %v654, 1.0
          %v659 = vrcp.pop %v655
          %v660 = vmul.f32 1.0, %v659
          %v661 = vrcp.pop %v656
          %v662 = vmul.f32 1.0, %v661
          %v663 = vrcp.pop %v657
          %v664 = vmul.f32 1.0, %v663
          %v665 = vrcp.pop %v658
          %v666 = vmul.f32 1.0, %v665
          %v667 = vadd.f32 %v477, %v660
          %v668 = vadd.f32 %v479, %v662
          %v669 = vadd.f32 %v481, %v664
          %v670 = vadd.f32 %v483, %v666
          %vm671 = vcmask 7168
          %672 = vst.msk [vmem:[%s205] sm:$0xff] %vm671, %v667
          %673 = vst.msk [vmem:[%s205 + $0x8] sm:$0xff] %vm671, %v668
          %674 = vst.msk [vmem:[%s205 + $0x10] sm:$0xff] %vm671, %v669
          %675 = vst.msk [vmem:[%s205 + $0x18] sm:$0xff] %vm671, %v670
        $region44: #{tpu_custom_call.1} parent=31 // pred_fallthru
          _
        %p676 = scmp.lt.s32.totalorder %s21, 1
        %s677 = scalar_select %p676, %s21, 1
        %s678 = smul.addr %s677, 4
        %s679 = smul.addr %s678, 8
        %s680 = scalar_lea.vmem %s3, %s679
        // Predicated region
        $region45: #{tpu_custom_call.1} parent=31 // pred_check
          %p681 = pneg %p117
        $region46: #{tpu_custom_call.1} parent=31 // pred_check_branch
          %683 = sbr.rel (%p681) target = $region48
        $region47: #{tpu_custom_call.1} parent=31 // pred_region
          _
        $region48: #{tpu_custom_call.1} parent=31 // pred_fallthru
          _
      $region32: #{tpu_custom_call.1} parent=5 // pred_fallthru
        _
      %p684 = scmp.le.s32.totalorder 2, %s12
      // Predicated region
      $region49: #{tpu_custom_call.1} parent=5 // pred_check
        %p685 = pneg %p684
      $region50: #{tpu_custom_call.1} parent=5 // pred_check_branch
        %687 = sbr.rel (%p685) target = $region52
      $region51: #{tpu_custom_call.1} parent=5 // pred_region
        %s688 = ssub.s32 %s12, 2
        // Predicated region
        $region53: #{tpu_custom_call.1} parent=51 // pred_check
          %p689 = pneg %p123
        $region54: #{tpu_custom_call.1} parent=51 // pred_check_branch
          %691 = sbr.rel (%p689) target = $region56
        $region55: #{tpu_custom_call.1} parent=51 // pred_region
          %p692 = scmp.lt.s32.totalorder %s23, 1
          %s693 = scalar_select %p692, %s23, 1
          %s694 = smul.addr %s693, 4
          %s695 = smul.addr %s694, 8
          %s696 = scalar_lea.vmem %s3, %s695
        $region56: #{tpu_custom_call.1} parent=51 // pred_fallthru
          _
      $region52: #{tpu_custom_call.1} parent=5 // pred_fallthru
        _
    $region6: #{tpu_custom_call.1} parent=1 // loop_footer
      %s16 = sadd.s32 1, %s12
    $region7: #{tpu_custom_call.1} parent=1 // loop_footer_branch
      %11 = sbr.rel target = $region3
    $region8: #{tpu_custom_call.1} parent=1 // loop_exit
      _
    %697 = vsyncpa [#allocation5], 1
    %s698 = scalar_lea.sflag [#allocation5], 1
    %699 = vsyncpa %s698, 1

</llo_original>
